<compile_context>
chip_gen: v7x
topology: tpu7x:2x2x1
jax: 0.10.0
libtpu: 0.0.40
codegen_flags: <defaults>
</compile_context>

<pallas_src>
import functools

import jax
import jax.numpy as jnp
from jax import lax
from jax.experimental import pallas as pl
from jax.experimental.pallas import tpu as pltpu

LANE = 128
SUBLANE = 8
ROW_BLOCK = 8                    # 8 sublanes: every (8,128) f32 slab = 1 vreg
_MAX_BLOCK_ELEMS = 1 << 20       # ~4 MiB of f32 per input block per grid step
_VMEM_LIMIT = 40 * 1024 * 1024   # > v5e's 16 MiB scoped default, < v7x 64 MiB


def _cdiv(a, b):
    return (a + b - 1) // b


def _round_up(x, m):
    return ((x + m - 1) // m) * m


def _combined_kernel(pred_ref, targ_ref, inter_ref, denom_ref, bce_ref, *,
                     n_slabs, tile, hw, kpc, unroll):
    """grid = (spatial split [parallel], row tiles [parallel], spatial tiles [arbitrary])."""
    c = pl.program_id(0)
    k = pl.program_id(2)

    @pl.when(k == 0)
    def _():
        inter_ref[...] = jnp.zeros_like(inter_ref)
        denom_ref[...] = jnp.zeros_like(denom_ref)
        bce_ref[...] = jnp.zeros_like(bce_ref)

    # Valid columns remaining in this *logical* block.  May be <= 0 (the clamped
    # fully-out-of-range block) or >= tile (fully valid block).
    rem = hw - (c * kpc + k) * tile

    def make_body(masked):
        col_iota = (lax.broadcasted_iota(jnp.int32, inter_ref.shape, 1)
                    if masked else None)

        def body(j, carry):
            acc_i, acc_d, acc_b = carry
            off = pl.multiple_of(j * LANE, LANE)
            x = pred_ref[:, pl.ds(off, LANE)].astype(jnp.float32)
            t = targ_ref[:, pl.ds(off, LANE)].astype(jnp.float32)
            # sigmoid via tanh (1 EUP op); BCEWithLogits via -log(sigmoid(|x|))
            # (1 EUP op) -> 2 transcendentals/element instead of 3.
            p = 0.5 + 0.5 * jnp.tanh(0.5 * x)                   # sigmoid(x)
            s = jnp.where(x >= 0, p, 1.0 - p)                   # sigmoid(|x|)
            bce = jnp.maximum(x, 0.0) - x * t - jnp.log(s)      # BCEWithLogits
            pt = p * t
            pd = p + t
            if masked:
                m = col_iota < (rem - off)
                pt = jnp.where(m, pt, 0.0)
                pd = jnp.where(m, pd, 0.0)
                bce = jnp.where(m, bce, 0.0)
            return (acc_i + pt, acc_d + pd, acc_b + bce)

        return body

    zeros = jnp.zeros(inter_ref.shape, jnp.float32)

    @pl.when(rem >= tile)   # common case: whole block in range, no masks
    def _():
        acc_i, acc_d, acc_b = lax.fori_loop(
            0, n_slabs, make_body(False), (zeros, zeros, zeros), unroll=unroll)
        inter_ref[...] += acc_i
        denom_ref[...] += acc_d
        bce_ref[...] += acc_b

    @pl.when(rem < tile)    # ragged / out-of-range boundary block
    def _():
        acc_i, acc_d, acc_b = lax.fori_loop(
            0, n_slabs, make_body(True), (zeros, zeros, zeros), unroll=unroll)
        inter_ref[...] += acc_i
        denom_ref[...] += acc_d
        bce_ref[...] += acc_b


def combined_dice_bce_loss(predictions, targets, *, dice_weight=1.0, bce_weight=1.0,
                           smooth=1e-6, focal_alpha=None, focal_gamma=2.0,
                           class_weights=None):
    """Forward pass of CombinedDiceBCELoss. predictions/targets: (B, C, *spatial).

    Inputs may be f32 or bf16 (bf16 halves HBM traffic; kernel upcasts per slab).
    """
    if focal_alpha is not None:
        # TODO(synk): BinaryFocalLoss branch (focal_alpha is not None) not implemented in-kernel.
        raise NotImplementedError("focal_alpha path not implemented")

    B, C = predictions.shape[0], predictions.shape[1]
    BC = B * C
    HW = 1
    for d in predictions.shape[2:]:
        HW *= d

    pred_flat = predictions.reshape(BC, HW)
    targ_flat = targets.reshape(BC, HW)

    # Row tiling: 8 sublanes (keeps accumulators/temps at 1 vreg each -> no spills).
    row_block = ROW_BLOCK
    n_row_blocks = _cdiv(BC, row_block)
    rows_pad = n_row_blocks * row_block

    # Spatial tile: multiple of 128 lanes, ~4 MiB per f32 input block.
    tile_cap = max(LANE, (_MAX_BLOCK_ELEMS // row_block) // LANE * LANE)
    tile = min(tile_cap, _round_up(HW, LANE))
    n_col_blocks = _cdiv(HW, tile)

    # Split the spatial reduction across up to 2 halves so v7x's second
    # TensorCore has work even when B*C is small; on single-core chips the
    # extra axis simply iterates.
    split = 2 if n_col_blocks >= 2 else 1
    kpc = _cdiv(n_col_blocks, split)

    n_slabs = tile // LANE
    unroll = max(1, min(4, n_slabs))
    grid = (split, n_row_blocks, kpc)
    itemsize = jnp.dtype(pred_flat.dtype).itemsize

    def in_map(c, i, k):
        # Clamp so the DMA never starts past the last block; fully out-of-range
        # logical blocks are masked to zero inside the kernel.
        return (i, jnp.minimum(c * kpc + k, n_col_blocks - 1))

    def out_map(c, i, k):
        return (c, i, 0)

    kernel = functools.partial(_combined_kernel, n_slabs=n_slabs, tile=tile,
                               hw=HW, kpc=kpc, unroll=unroll)
    out_lane = jax.ShapeDtypeStruct((split, rows_pad, LANE), jnp.float32)

    inter_l, denom_l, bce_l = pl.pallas_call(
        kernel,
        out_shape=(out_lane, out_lane, out_lane),
        grid_spec=pltpu.PrefetchScalarGridSpec(
            num_scalar_prefetch=0,
            grid=grid,
            in_specs=(
                pl.BlockSpec((row_block, tile), in_map),
                pl.BlockSpec((row_block, tile), in_map),
            ),
            out_specs=(
                pl.BlockSpec((None, row_block, LANE), out_map),
                pl.BlockSpec((None, row_block, LANE), out_map),
                pl.BlockSpec((None, row_block, LANE), out_map),
            ),
        ),
        compiler_params=pltpu.CompilerParams(
            dimension_semantics=("parallel", "parallel", "arbitrary"),
            vmem_limit_bytes=_VMEM_LIMIT),
        cost_estimate=pl.CostEstimate(
            flops=int(14 * BC * HW),
            transcendentals=int(2 * BC * HW),
            bytes_accessed=int(2 * BC * HW * itemsize
                               + 3 * split * rows_pad * LANE * 4)),
    )(pred_flat, targ_flat)

    # Tiny epilogue in plain JAX: cross-lane/split reduce + scalar combine.
    inter = inter_l.sum(axis=(0, 2))[:BC]          # (BC,) dice intersection
    denom = denom_l.sum(axis=(0, 2))[:BC]          # (BC,) pred_sum + target_sum
    bce_total = bce_l[:, :BC, :].sum()

    dice_coeff = (2.0 * inter + smooth) / (denom + smooth)
    dice_per = (1.0 - dice_coeff).reshape(B, C)
    if class_weights is not None:
        dice_per = dice_per * jnp.asarray(class_weights, jnp.float32)[None, :]
    dice_loss = dice_per.mean()
    bce_loss = bce_total / (BC * HW)
    total_loss = dice_weight * dice_loss + bce_weight * bce_loss

    return {"total_loss": total_loss, "dice_loss": dice_loss, "bce_loss": bce_loss,
            "dice_weight": dice_weight, "bce_weight": bce_weight}


def _reference_combined(predictions, targets, dice_weight=1.0, bce_weight=1.0,
                        smooth=1e-6, class_weights=None):
    x = predictions.astype(jnp.float32)
    t = targets.astype(jnp.float32)
    p = jax.nn.sigmoid(x)
    B, C = x.shape[0], x.shape[1]
    pf = p.reshape(B, C, -1)
    tf = t.reshape(B, C, -1)
    inter = (pf * tf).sum(-1)
    ps = pf.sum(-1)
    ts = tf.sum(-1)
    dice = 1.0 - (2.0 * inter + smooth) / (ps + ts + smooth)
    if class_weights is not None:
        dice = dice * jnp.asarray(class_weights, jnp.float32)[None, :]
    dice_loss = dice.mean()
    bce = jnp.maximum(x, 0.0) - x * t + jnp.log1p(jnp.exp(-jnp.abs(x)))
    bce_loss = bce.mean()
    total = dice_weight * dice_loss + bce_weight * bce_loss
    return total, dice_loss, bce_loss


if __name__ == "__main__":
    key = jax.random.PRNGKey(0)
    k1, k2 = jax.random.split(key)

    B, C, H, W = 2, 4, 16, 16
    predictions = jax.random.normal(k1, (B, C, H, W), dtype=jnp.float32)
    targets = (jax.random.uniform(k2, (B, C, H, W)) > 0.5).astype(jnp.float32)

    out = combined_dice_bce_loss(predictions, targets)
    out = jax.block_until_ready(out)

    ref_total, ref_dice, ref_bce = _reference_combined(predictions, targets)
    assert jnp.allclose(out["total_loss"], ref_total, atol=1e-5, rtol=1e-5), (out["total_loss"], ref_total)
    assert jnp.allclose(out["dice_loss"], ref_dice, atol=1e-5, rtol=1e-5), (out["dice_loss"], ref_dice)
    assert jnp.allclose(out["bce_loss"], ref_bce, atol=1e-5, rtol=1e-5), (out["bce_loss"], ref_bce)

    print("KERNEL_OK")
</pallas_src>

<mosaic_0001>
module attributes {stable_mosaic.version = 11 : i64} {
  func.func @_combined_kernel(%arg0: i32, %arg1: i32, %arg2: i32, %arg3: memref<8x256xf32, #tpu.memory_space<vmem>>, %arg4: memref<8x256xf32, #tpu.memory_space<vmem>>, %arg5: memref<1x8x128xf32, #tpu.memory_space<vmem>>, %arg6: memref<1x8x128xf32, #tpu.memory_space<vmem>>, %arg7: memref<1x8x128xf32, #tpu.memory_space<vmem>>) attributes {dimension_semantics = [#tpu.dimension_semantics<parallel>, #tpu.dimension_semantics<parallel>, #tpu.dimension_semantics<arbitrary>], iteration_bounds = array<i64: 1, 1, 1>, scalar_prefetch = 0 : i64, scratch_operands = 0 : i64, tpu.core_type = #tpu.core_type<tc>, window_params = [{transform_indices = @transform_0, window_bounds = array<i64: 8, 256>}, {transform_indices = @transform_1, window_bounds = array<i64: 8, 256>}, {transform_indices = @transform_2, window_bounds = array<i64: 1, 8, 128>}, {transform_indices = @transform_3, window_bounds = array<i64: 1, 8, 128>}, {transform_indices = @transform_4, window_bounds = array<i64: 1, 8, 128>}]} {
    %c0_i32 = arith.constant 0 : i32
    %0 = arith.cmpi eq, %arg2, %c0_i32 : i32
    %1 = arith.extui %0 : i1 to i32
    %c0_i32_0 = arith.constant 0 : i32
    %2 = arith.cmpi ne, %1, %c0_i32_0 : i32
    scf.if %2 {
      %cst_6 = arith.constant 0.000000e+00 : f32
      %14 = vector.broadcast %cst_6 : f32 to vector<8x128xf32>
      %c0 = arith.constant 0 : index
      %c0_7 = arith.constant 0 : index
      %c0_8 = arith.constant 0 : index
      %15 = vector.load %arg5[%c0, %c0_7, %c0_8] : memref<1x8x128xf32, #tpu.memory_space<vmem>>, vector<1x8x128xf32>
      %16 = vector.shape_cast %15 : vector<1x8x128xf32> to vector<8x128xf32>
      %17 = vector.shape_cast %14 : vector<8x128xf32> to vector<1x8x128xf32>
      tpu.vector_store %arg5[%c0, %c0_7, %c0_8], %17 {strides = array<i32>} : memref<1x8x128xf32, #tpu.memory_space<vmem>>, vector<1x8x128xf32>,
      %cst_9 = arith.constant 0.000000e+00 : f32
      %18 = vector.broadcast %cst_9 : f32 to vector<8x128xf32>
      %c0_10 = arith.constant 0 : index
      %c0_11 = arith.constant 0 : index
      %c0_12 = arith.constant 0 : index
      %19 = vector.load %arg6[%c0_10, %c0_11, %c0_12] : memref<1x8x128xf32, #tpu.memory_space<vmem>>, vector<1x8x128xf32>
      %20 = vector.shape_cast %19 : vector<1x8x128xf32> to vector<8x128xf32>
      %21 = vector.shape_cast %18 : vector<8x128xf32> to vector<1x8x128xf32>
      tpu.vector_store %arg6[%c0_10, %c0_11, %c0_12], %21 {strides = array<i32>} : memref<1x8x128xf32, #tpu.memory_space<vmem>>, vector<1x8x128xf32>,
      %cst_13 = arith.constant 0.000000e+00 : f32
      %22 = vector.broadcast %cst_13 : f32 to vector<8x128xf32>
      %c0_14 = arith.constant 0 : index
      %c0_15 = arith.constant 0 : index
      %c0_16 = arith.constant 0 : index
      %23 = vector.load %arg7[%c0_14, %c0_15, %c0_16] : memref<1x8x128xf32, #tpu.memory_space<vmem>>, vector<1x8x128xf32>
      %24 = vector.shape_cast %23 : vector<1x8x128xf32> to vector<8x128xf32>
      %25 = vector.shape_cast %22 : vector<8x128xf32> to vector<1x8x128xf32>
      tpu.vector_store %arg7[%c0_14, %c0_15, %c0_16], %25 {strides = array<i32>} : memref<1x8x128xf32, #tpu.memory_space<vmem>>, vector<1x8x128xf32>,
    } else {
    }
    %c1_i32 = arith.constant 1 : i32
    %3 = arith.muli %arg0, %c1_i32 : i32
    %4 = arith.addi %3, %arg2 : i32
    %c256_i32 = arith.constant 256 : i32
    %5 = arith.muli %4, %c256_i32 : i32
    %c256_i32_1 = arith.constant 256 : i32
    %6 = arith.subi %c256_i32_1, %5 : i32
    %cst = arith.constant 0.000000e+00 : f32
    %7 = vector.broadcast %cst : f32 to vector<8x128xf32>
    %c256_i32_2 = arith.constant 256 : i32
    %8 = arith.cmpi sge, %6, %c256_i32_2 : i32
    %9 = arith.extui %8 : i1 to i32
    %c0_i32_3 = arith.constant 0 : i32
    %10 = arith.cmpi ne, %9, %c0_i32_3 : i32
    scf.if %10 {
      %c0_i32_6 = arith.constant 0 : i32
      %c128_i32 = arith.constant 128 : i32
      %14 = arith.muli %c0_i32_6, %c128_i32 : i32
      %15 = tpu.assume_multiple %14, 128 : i32
      %c0 = arith.constant 0 : index
      %16 = arith.index_cast %15 : i32 to index
      %17 = vector.load %arg3[%c0, %16] : memref<8x256xf32, #tpu.memory_space<vmem>>, vector<8x128xf32>
      %c0_7 = arith.constant 0 : index
      %18 = arith.index_cast %15 : i32 to index
      %19 = vector.load %arg4[%c0_7, %18] : memref<8x256xf32, #tpu.memory_space<vmem>>, vector<8x128xf32>
      %cst_8 = arith.constant 5.000000e-01 : f32
      %20 = vector.broadcast %cst_8 : f32 to vector<8x128xf32>
      %21 = arith.mulf %20, %17 : vector<8x128xf32>
      %22 = math.tanh %21 : vector<8x128xf32>
      %cst_9 = arith.constant 5.000000e-01 : f32
      %23 = vector.broadcast %cst_9 : f32 to vector<8x128xf32>
      %24 = arith.mulf %23, %22 : vector<8x128xf32>
      %cst_10 = arith.constant 5.000000e-01 : f32
      %25 = vector.broadcast %cst_10 : f32 to vector<8x128xf32>
      %26 = arith.addf %25, %24 : vector<8x128xf32>
      %cst_11 = arith.constant 0.000000e+00 : f32
      %27 = vector.broadcast %cst_11 : f32 to vector<8x128xf32>
      %28 = arith.cmpf oge, %17, %27 : vector<8x128xf32>
      %cst_12 = arith.constant 1.000000e+00 : f32
      %29 = vector.broadcast %cst_12 : f32 to vector<8x128xf32>
      %30 = arith.subf %29, %26 : vector<8x128xf32>
      %31 = arith.select %28, %26, %30 : vector<8x128xi1>, vector<8x128xf32>
      %cst_13 = arith.constant 0.000000e+00 : f32
      %32 = vector.broadcast %cst_13 : f32 to vector<8x128xf32>
      %33 = arith.maximumf %17, %32 : vector<8x128xf32>
      %34 = arith.mulf %17, %19 : vector<8x128xf32>
      %35 = arith.subf %33, %34 : vector<8x128xf32>
      %36 = math.log %31 : vector<8x128xf32>
      %37 = arith.subf %35, %36 : vector<8x128xf32>
      %38 = arith.mulf %26, %19 : vector<8x128xf32>
      %39 = arith.addf %26, %19 : vector<8x128xf32>
      %40 = arith.addf %7, %38 : vector<8x128xf32>
      %41 = arith.addf %7, %39 : vector<8x128xf32>
      %42 = arith.addf %7, %37 : vector<8x128xf32>
      %c1_i32_14 = arith.constant 1 : i32
      %c128_i32_15 = arith.constant 128 : i32
      %43 = arith.muli %c1_i32_14, %c128_i32_15 : i32
      %44 = tpu.assume_multiple %43, 128 : i32
      %c0_16 = arith.constant 0 : index
      %45 = arith.index_cast %44 : i32 to index
      %46 = vector.load %arg3[%c0_16, %45] : memref<8x256xf32, #tpu.memory_space<vmem>>, vector<8x128xf32>
      %c0_17 = arith.constant 0 : index
      %47 = arith.index_cast %44 : i32 to index
      %48 = vector.load %arg4[%c0_17, %47] : memref<8x256xf32, #tpu.memory_space<vmem>>, vector<8x128xf32>
      %cst_18 = arith.constant 5.000000e-01 : f32
      %49 = vector.broadcast %cst_18 : f32 to vector<8x128xf32>
      %50 = arith.mulf %49, %46 : vector<8x128xf32>
      %51 = math.tanh %50 : vector<8x128xf32>
      %cst_19 = arith.constant 5.000000e-01 : f32
      %52 = vector.broadcast %cst_19 : f32 to vector<8x128xf32>
      %53 = arith.mulf %52, %51 : vector<8x128xf32>
      %cst_20 = arith.constant 5.000000e-01 : f32
      %54 = vector.broadcast %cst_20 : f32 to vector<8x128xf32>
      %55 = arith.addf %54, %53 : vector<8x128xf32>
      %cst_21 = arith.constant 0.000000e+00 : f32
      %56 = vector.broadcast %cst_21 : f32 to vector<8x128xf32>
      %57 = arith.cmpf oge, %46, %56 : vector<8x128xf32>
      %cst_22 = arith.constant 1.000000e+00 : f32
      %58 = vector.broadcast %cst_22 : f32 to vector<8x128xf32>
      %59 = arith.subf %58, %55 : vector<8x128xf32>
      %60 = arith.select %57, %55, %59 : vector<8x128xi1>, vector<8x128xf32>
      %cst_23 = arith.constant 0.000000e+00 : f32
      %61 = vector.broadcast %cst_23 : f32 to vector<8x128xf32>
      %62 = arith.maximumf %46, %61 : vector<8x128xf32>
      %63 = arith.mulf %46, %48 : vector<8x128xf32>
      %64 = arith.subf %62, %63 : vector<8x128xf32>
      %65 = math.log %60 : vector<8x128xf32>
      %66 = arith.subf %64, %65 : vector<8x128xf32>
      %67 = arith.mulf %55, %48 : vector<8x128xf32>
      %68 = arith.addf %55, %48 : vector<8x128xf32>
      %69 = arith.addf %40, %67 : vector<8x128xf32>
      %70 = arith.addf %41, %68 : vector<8x128xf32>
      %71 = arith.addf %42, %66 : vector<8x128xf32>
      %c2_i32 = arith.constant 2 : i32
      %c0_24 = arith.constant 0 : index
      %c0_25 = arith.constant 0 : index
      %c0_26 = arith.constant 0 : index
      %72 = vector.load %arg5[%c0_24, %c0_25, %c0_26] : memref<1x8x128xf32, #tpu.memory_space<vmem>>, vector<1x8x128xf32>
      %73 = vector.shape_cast %72 : vector<1x8x128xf32> to vector<8x128xf32>
      %74 = arith.addf %73, %69 : vector<8x128xf32>
      %c0_27 = arith.constant 0 : index
      %c0_28 = arith.constant 0 : index
      %c0_29 = arith.constant 0 : index
      %75 = vector.load %arg5[%c0_27, %c0_28, %c0_29] : memref<1x8x128xf32, #tpu.memory_space<vmem>>, vector<1x8x128xf32>
      %76 = vector.shape_cast %75 : vector<1x8x128xf32> to vector<8x128xf32>
      %77 = vector.shape_cast %74 : vector<8x128xf32> to vector<1x8x128xf32>
      tpu.vector_store %arg5[%c0_27, %c0_28, %c0_29], %77 {strides = array<i32>} : memref<1x8x128xf32, #tpu.memory_space<vmem>>, vector<1x8x128xf32>,
      %c0_30 = arith.constant 0 : index
      %c0_31 = arith.constant 0 : index
      %c0_32 = arith.constant 0 : index
      %78 = vector.load %arg6[%c0_30, %c0_31, %c0_32] : memref<1x8x128xf32, #tpu.memory_space<vmem>>, vector<1x8x128xf32>
      %79 = vector.shape_cast %78 : vector<1x8x128xf32> to vector<8x128xf32>
      %80 = arith.addf %79, %70 : vector<8x128xf32>
      %c0_33 = arith.constant 0 : index
      %c0_34 = arith.constant 0 : index
      %c0_35 = arith.constant 0 : index
      %81 = vector.load %arg6[%c0_33, %c0_34, %c0_35] : memref<1x8x128xf32, #tpu.memory_space<vmem>>, vector<1x8x128xf32>
      %82 = vector.shape_cast %81 : vector<1x8x128xf32> to vector<8x128xf32>
      %83 = vector.shape_cast %80 : vector<8x128xf32> to vector<1x8x128xf32>
      tpu.vector_store %arg6[%c0_33, %c0_34, %c0_35], %83 {strides = array<i32>} : memref<1x8x128xf32, #tpu.memory_space<vmem>>, vector<1x8x128xf32>,
      %c0_36 = arith.constant 0 : index
      %c0_37 = arith.constant 0 : index
      %c0_38 = arith.constant 0 : index
      %84 = vector.load %arg7[%c0_36, %c0_37, %c0_38] : memref<1x8x128xf32, #tpu.memory_space<vmem>>, vector<1x8x128xf32>
      %85 = vector.shape_cast %84 : vector<1x8x128xf32> to vector<8x128xf32>
      %86 = arith.addf %85, %71 : vector<8x128xf32>
      %c0_39 = arith.constant 0 : index
      %c0_40 = arith.constant 0 : index
      %c0_41 = arith.constant 0 : index
      %87 = vector.load %arg7[%c0_39, %c0_40, %c0_41] : memref<1x8x128xf32, #tpu.memory_space<vmem>>, vector<1x8x128xf32>
      %88 = vector.shape_cast %87 : vector<1x8x128xf32> to vector<8x128xf32>
      %89 = vector.shape_cast %86 : vector<8x128xf32> to vector<1x8x128xf32>
      tpu.vector_store %arg7[%c0_39, %c0_40, %c0_41], %89 {strides = array<i32>} : memref<1x8x128xf32, #tpu.memory_space<vmem>>, vector<1x8x128xf32>,
    } else {
    }
    %c256_i32_4 = arith.constant 256 : i32
    %11 = arith.cmpi slt, %6, %c256_i32_4 : i32
    %12 = arith.extui %11 : i1 to i32
    %c0_i32_5 = arith.constant 0 : i32
    %13 = arith.cmpi ne, %12, %c0_i32_5 : i32
    scf.if %13 {
      %14 = tpu.iota {dimensions = array<i32: 1>} : vector<8x128xi32>
      %c0_i32_6 = arith.constant 0 : i32
      %c128_i32 = arith.constant 128 : i32
      %15 = arith.muli %c0_i32_6, %c128_i32 : i32
      %16 = tpu.assume_multiple %15, 128 : i32
      %c0 = arith.constant 0 : index
      %17 = arith.index_cast %16 : i32 to index
      %18 = vector.load %arg3[%c0, %17] : memref<8x256xf32, #tpu.memory_space<vmem>>, vector<8x128xf32>
      %c0_7 = arith.constant 0 : index
      %19 = arith.index_cast %16 : i32 to index
      %20 = vector.load %arg4[%c0_7, %19] : memref<8x256xf32, #tpu.memory_space<vmem>>, vector<8x128xf32>
      %cst_8 = arith.constant 5.000000e-01 : f32
      %21 = vector.broadcast %cst_8 : f32 to vector<8x128xf32>
      %22 = arith.mulf %21, %18 : vector<8x128xf32>
      %23 = math.tanh %22 : vector<8x128xf32>
      %cst_9 = arith.constant 5.000000e-01 : f32
      %24 = vector.broadcast %cst_9 : f32 to vector<8x128xf32>
      %25 = arith.mulf %24, %23 : vector<8x128xf32>
      %cst_10 = arith.constant 5.000000e-01 : f32
      %26 = vector.broadcast %cst_10 : f32 to vector<8x128xf32>
      %27 = arith.addf %26, %25 : vector<8x128xf32>
      %cst_11 = arith.constant 0.000000e+00 : f32
      %28 = vector.broadcast %cst_11 : f32 to vector<8x128xf32>
      %29 = arith.cmpf oge, %18, %28 : vector<8x128xf32>
      %cst_12 = arith.constant 1.000000e+00 : f32
      %30 = vector.broadcast %cst_12 : f32 to vector<8x128xf32>
      %31 = arith.subf %30, %27 : vector<8x128xf32>
      %32 = arith.select %29, %27, %31 : vector<8x128xi1>, vector<8x128xf32>
      %cst_13 = arith.constant 0.000000e+00 : f32
      %33 = vector.broadcast %cst_13 : f32 to vector<8x128xf32>
      %34 = arith.maximumf %18, %33 : vector<8x128xf32>
      %35 = arith.mulf %18, %20 : vector<8x128xf32>
      %36 = arith.subf %34, %35 : vector<8x128xf32>
      %37 = math.log %32 : vector<8x128xf32>
      %38 = arith.subf %36, %37 : vector<8x128xf32>
      %39 = arith.mulf %27, %20 : vector<8x128xf32>
      %40 = arith.addf %27, %20 : vector<8x128xf32>
      %41 = arith.subi %6, %16 : i32
      %42 = vector.broadcast %41 : i32 to vector<8x128xi32>
      %43 = arith.cmpi slt, %14, %42 : vector<8x128xi32>
      %cst_14 = arith.constant 0.000000e+00 : f32
      %44 = vector.broadcast %cst_14 : f32 to vector<8x128xf32>
      %45 = arith.select %43, %39, %44 : vector<8x128xi1>, vector<8x128xf32>
      %cst_15 = arith.constant 0.000000e+00 : f32
      %46 = vector.broadcast %cst_15 : f32 to vector<8x128xf32>
      %47 = arith.select %43, %40, %46 : vector<8x128xi1>, vector<8x128xf32>
      %cst_16 = arith.constant 0.000000e+00 : f32
      %48 = vector.broadcast %cst_16 : f32 to vector<8x128xf32>
      %49 = arith.select %43, %38, %48 : vector<8x128xi1>, vector<8x128xf32>
      %50 = arith.addf %7, %45 : vector<8x128xf32>
      %51 = arith.addf %7, %47 : vector<8x128xf32>
      %52 = arith.addf %7, %49 : vector<8x128xf32>
      %c1_i32_17 = arith.constant 1 : i32
      %c128_i32_18 = arith.constant 128 : i32
      %53 = arith.muli %c1_i32_17, %c128_i32_18 : i32
      %54 = tpu.assume_multiple %53, 128 : i32
      %c0_19 = arith.constant 0 : index
      %55 = arith.index_cast %54 : i32 to index
      %56 = vector.load %arg3[%c0_19, %55] : memref<8x256xf32, #tpu.memory_space<vmem>>, vector<8x128xf32>
      %c0_20 = arith.constant 0 : index
      %57 = arith.index_cast %54 : i32 to index
      %58 = vector.load %arg4[%c0_20, %57] : memref<8x256xf32, #tpu.memory_space<vmem>>, vector<8x128xf32>
      %cst_21 = arith.constant 5.000000e-01 : f32
      %59 = vector.broadcast %cst_21 : f32 to vector<8x128xf32>
      %60 = arith.mulf %59, %56 : vector<8x128xf32>
      %61 = math.tanh %60 : vector<8x128xf32>
      %cst_22 = arith.constant 5.000000e-01 : f32
      %62 = vector.broadcast %cst_22 : f32 to vector<8x128xf32>
      %63 = arith.mulf %62, %61 : vector<8x128xf32>
      %cst_23 = arith.constant 5.000000e-01 : f32
      %64 = vector.broadcast %cst_23 : f32 to vector<8x128xf32>
      %65 = arith.addf %64, %63 : vector<8x128xf32>
      %cst_24 = arith.constant 0.000000e+00 : f32
      %66 = vector.broadcast %cst_24 : f32 to vector<8x128xf32>
      %67 = arith.cmpf oge, %56, %66 : vector<8x128xf32>
      %cst_25 = arith.constant 1.000000e+00 : f32
      %68 = vector.broadcast %cst_25 : f32 to vector<8x128xf32>
      %69 = arith.subf %68, %65 : vector<8x128xf32>
      %70 = arith.select %67, %65, %69 : vector<8x128xi1>, vector<8x128xf32>
      %cst_26 = arith.constant 0.000000e+00 : f32
      %71 = vector.broadcast %cst_26 : f32 to vector<8x128xf32>
      %72 = arith.maximumf %56, %71 : vector<8x128xf32>
      %73 = arith.mulf %56, %58 : vector<8x128xf32>
      %74 = arith.subf %72, %73 : vector<8x128xf32>
      %75 = math.log %70 : vector<8x128xf32>
      %76 = arith.subf %74, %75 : vector<8x128xf32>
      %77 = arith.mulf %65, %58 : vector<8x128xf32>
      %78 = arith.addf %65, %58 : vector<8x128xf32>
      %79 = arith.subi %6, %54 : i32
      %80 = vector.broadcast %79 : i32 to vector<8x128xi32>
      %81 = arith.cmpi slt, %14, %80 : vector<8x128xi32>
      %cst_27 = arith.constant 0.000000e+00 : f32
      %82 = vector.broadcast %cst_27 : f32 to vector<8x128xf32>
      %83 = arith.select %81, %77, %82 : vector<8x128xi1>, vector<8x128xf32>
      %cst_28 = arith.constant 0.000000e+00 : f32
      %84 = vector.broadcast %cst_28 : f32 to vector<8x128xf32>
      %85 = arith.select %81, %78, %84 : vector<8x128xi1>, vector<8x128xf32>
      %cst_29 = arith.constant 0.000000e+00 : f32
      %86 = vector.broadcast %cst_29 : f32 to vector<8x128xf32>
      %87 = arith.select %81, %76, %86 : vector<8x128xi1>, vector<8x128xf32>
      %88 = arith.addf %50, %83 : vector<8x128xf32>
      %89 = arith.addf %51, %85 : vector<8x128xf32>
      %90 = arith.addf %52, %87 : vector<8x128xf32>
      %c2_i32 = arith.constant 2 : i32
      %c0_30 = arith.constant 0 : index
      %c0_31 = arith.constant 0 : index
      %c0_32 = arith.constant 0 : index
      %91 = vector.load %arg5[%c0_30, %c0_31, %c0_32] : memref<1x8x128xf32, #tpu.memory_space<vmem>>, vector<1x8x128xf32>
      %92 = vector.shape_cast %91 : vector<1x8x128xf32> to vector<8x128xf32>
      %93 = arith.addf %92, %88 : vector<8x128xf32>
      %c0_33 = arith.constant 0 : index
      %c0_34 = arith.constant 0 : index
      %c0_35 = arith.constant 0 : index
      %94 = vector.load %arg5[%c0_33, %c0_34, %c0_35] : memref<1x8x128xf32, #tpu.memory_space<vmem>>, vector<1x8x128xf32>
      %95 = vector.shape_cast %94 : vector<1x8x128xf32> to vector<8x128xf32>
      %96 = vector.shape_cast %93 : vector<8x128xf32> to vector<1x8x128xf32>
      tpu.vector_store %arg5[%c0_33, %c0_34, %c0_35], %96 {strides = array<i32>} : memref<1x8x128xf32, #tpu.memory_space<vmem>>, vector<1x8x128xf32>,
      %c0_36 = arith.constant 0 : index
      %c0_37 = arith.constant 0 : index
      %c0_38 = arith.constant 0 : index
      %97 = vector.load %arg6[%c0_36, %c0_37, %c0_38] : memref<1x8x128xf32, #tpu.memory_space<vmem>>, vector<1x8x128xf32>
      %98 = vector.shape_cast %97 : vector<1x8x128xf32> to vector<8x128xf32>
      %99 = arith.addf %98, %89 : vector<8x128xf32>
      %c0_39 = arith.constant 0 : index
      %c0_40 = arith.constant 0 : index
      %c0_41 = arith.constant 0 : index
      %100 = vector.load %arg6[%c0_39, %c0_40, %c0_41] : memref<1x8x128xf32, #tpu.memory_space<vmem>>, vector<1x8x128xf32>
      %101 = vector.shape_cast %100 : vector<1x8x128xf32> to vector<8x128xf32>
      %102 = vector.shape_cast %99 : vector<8x128xf32> to vector<1x8x128xf32>
      tpu.vector_store %arg6[%c0_39, %c0_40, %c0_41], %102 {strides = array<i32>} : memref<1x8x128xf32, #tpu.memory_space<vmem>>, vector<1x8x128xf32>,
      %c0_42 = arith.constant 0 : index
      %c0_43 = arith.constant 0 : index
      %c0_44 = arith.constant 0 : index
      %103 = vector.load %arg7[%c0_42, %c0_43, %c0_44] : memref<1x8x128xf32, #tpu.memory_space<vmem>>, vector<1x8x128xf32>
      %104 = vector.shape_cast %103 : vector<1x8x128xf32> to vector<8x128xf32>
      %105 = arith.addf %104, %90 : vector<8x128xf32>
      %c0_45 = arith.constant 0 : index
      %c0_46 = arith.constant 0 : index
      %c0_47 = arith.constant 0 : index
      %106 = vector.load %arg7[%c0_45, %c0_46, %c0_47] : memref<1x8x128xf32, #tpu.memory_space<vmem>>, vector<1x8x128xf32>
      %107 = vector.shape_cast %106 : vector<1x8x128xf32> to vector<8x128xf32>
      %108 = vector.shape_cast %105 : vector<8x128xf32> to vector<1x8x128xf32>
      tpu.vector_store %arg7[%c0_45, %c0_46, %c0_47], %108 {strides = array<i32>} : memref<1x8x128xf32, #tpu.memory_space<vmem>>, vector<1x8x128xf32>,
    } else {
    }
    return
  }
  func.func @transform_0(%arg0: i32, %arg1: i32, %arg2: i32) -> (i32, i32) {
    %c1_i32 = arith.constant 1 : i32
    %0 = arith.muli %arg0, %c1_i32 : i32
    %1 = arith.addi %0, %arg2 : i32
    %c0_i32 = arith.constant 0 : i32
    %2 = arith.minsi %1, %c0_i32 : i32
    %c0_i32_0 = arith.constant 0 : i32
    return %arg1, %2 : i32, i32
  }
  func.func @transform_1(%arg0: i32, %arg1: i32, %arg2: i32) -> (i32, i32) {
    %c1_i32 = arith.constant 1 : i32
    %0 = arith.muli %arg0, %c1_i32 : i32
    %1 = arith.addi %0, %arg2 : i32
    %c0_i32 = arith.constant 0 : i32
    %2 = arith.minsi %1, %c0_i32 : i32
    %c0_i32_0 = arith.constant 0 : i32
    return %arg1, %2 : i32, i32
  }
  func.func @transform_2(%arg0: i32, %arg1: i32, %arg2: i32) -> (i32, i32, i32) {
    %c0_i32 = arith.constant 0 : i32
    %c0_i32_0 = arith.constant 0 : i32
    return %arg0, %arg1, %c0_i32 : i32, i32, i32
  }
  func.func @transform_3(%arg0: i32, %arg1: i32, %arg2: i32) -> (i32, i32, i32) {
    %c0_i32 = arith.constant 0 : i32
    %c0_i32_0 = arith.constant 0 : i32
    return %arg0, %arg1, %c0_i32 : i32, i32, i32
  }
  func.func @transform_4(%arg0: i32, %arg1: i32, %arg2: i32) -> (i32, i32, i32) {
    %c0_i32 = arith.constant 0 : i32
    %c0_i32_0 = arith.constant 0 : i32
    return %arg0, %arg1, %c0_i32 : i32, i32, i32
  }
}

</mosaic_0001>

<llo_original>
// kernel: tpu_custom_call.1
$region0: #{tpu_custom_call.1}
  #allocation0 [shape = 'u32[]', space=smem, size = 0x4, offset = 0x4, fixed_abs, tag = 'smem constant byte address 0x4 - core index']
  #allocation1 [shape = 'u32[144,128]{1,0:T(1,128)}', space=vmem, size = 0x12000, scoped, tag = 'internal scratch']
  %s0 = inlined_call_operand.hbm [shape: f32[8,256], index: 0, kind: input, shape index: {}]
  %s1 = inlined_call_operand.hbm [shape: f32[8,256], index: 1, kind: input, shape index: {}]
  %s2 = inlined_call_operand.hbm [shape: f32[1,8,128], index: 2, kind: output, shape index: {0}]
  %s3 = inlined_call_operand.hbm [shape: f32[1,8,128], index: 3, kind: output, shape index: {1}]
  %s4 = inlined_call_operand.hbm [shape: f32[1,8,128], index: 4, kind: output, shape index: {2}]
  %5 = xla_tuple %s2, %s3, %s4
  %s6 = sld [smem:[#allocation0]]
  $region54: #{tpu_custom_call.1} parent=0
    _
  %s8 = ssub.s32 1, %s6
  %s9 = scalar_select 0, %s8, %s6
  $region1: #{tpu_custom_call.1} parent=0
    #allocation2 [shape = 'u8[8192]{0}', space=vmem, size = 0x2000, scoped, tag = 'input window, operand 0, single buffered']
    #allocation3 [shape = 's32[1]{0}', space=sflag, size = 0x4, scoped, tag = 'scoped memory for tpu_custom_call.1']
    #allocation4 [shape = 's32[1]{0}', space=sflag, size = 0x4, scoped, tag = 'scoped memory for tpu_custom_call.1']
    #allocation5 [shape = 'u8[8192]{0}', space=vmem, size = 0x2000, scoped, tag = 'input window, operand 1, single buffered']
    #allocation6 [shape = 's32[1]{0}', space=sflag, size = 0x4, scoped, tag = 'scoped memory for tpu_custom_call.1']
    #allocation7 [shape = 'u8[4096]{0}', space=vmem, size = 0x1000, scoped, tag = 'output window, operand 0, single buffered']
    #allocation8 [shape = 'u8[4096]{0}', space=vmem, size = 0x1000, scoped, tag = 'output window, operand 1, single buffered']
    #allocation9 [shape = 's32[1]{0}', space=sflag, size = 0x4, scoped, tag = 'scoped memory for tpu_custom_call.1']
    #allocation10 [shape = 'u8[4096]{0}', space=vmem, size = 0x1000, scoped, tag = 'output window, operand 2, single buffered']
    %10 = vsyncpa [#allocation3], 0
    %11 = vsyncpa [#allocation6], 0
    %12 = vsyncpa [#allocation4], 0
    %13 = vsyncpa [#allocation9], 0
    // Predicated region
    $region2: #{tpu_custom_call.1} parent=1 // pred_check
      _
    $region3: #{tpu_custom_call.1} parent=1 // pred_check_branch
      %15 = sbr.rel (0) target = $region5
    $region4: #{tpu_custom_call.1} parent=1 // pred_region
      %s16 = sadd.s32 0, 0
      %p17 = scmp.lt.s32.totalorder %s16, 0
      %s18 = scalar_select %p17, %s16, 0
      %s19 = smul.u32 2, %s18
      %s21 = ssub.s32 256, 256
      %22 = vsyncadd [#allocation3], %s21
      %s23 = smul.addr %s19, 128
      %s24 = scalar_lea.hbm %s0, %s23
      %s26 = sshll.u32 [#allocation2], 4
      %s27 = int_to_ptr.vmem [resolvable:$true] %s26
      %29 = dma.hbm_to_vmem [thread:$0]  %s24, 256, %s27, [#allocation3]
    $region5: #{tpu_custom_call.1} parent=1 // pred_fallthru
      _
    // Predicated region
    $region6: #{tpu_custom_call.1} parent=1 // pred_check
      _
    $region7: #{tpu_custom_call.1} parent=1 // pred_check_branch
      %31 = sbr.rel (0) target = $region9
    $region8: #{tpu_custom_call.1} parent=1 // pred_region
      %s32 = sadd.s32 0, 0
      %p33 = scmp.lt.s32.totalorder %s32, 0
      %s34 = scalar_select %p33, %s32, 0
      %s35 = smul.u32 2, %s34
      %s37 = ssub.s32 256, 256
      %38 = vsyncadd [#allocation6], %s37
      %s39 = smul.addr %s35, 128
      %s40 = scalar_lea.hbm %s1, %s39
      %s42 = sshll.u32 [#allocation5], 4
      %s43 = int_to_ptr.vmem [resolvable:$true] %s42
      %45 = dma.hbm_to_vmem [thread:$0]  %s40, 256, %s43, [#allocation6]
    $region9: #{tpu_custom_call.1} parent=1 // pred_fallthru
      _
    // Predicated region
    $region10: #{tpu_custom_call.1} parent=1 // pred_check
      _
    $region11: #{tpu_custom_call.1} parent=1 // pred_check_branch
      %47 = sbr.rel (0) target = $region13
    $region12: #{tpu_custom_call.1} parent=1 // pred_region
      %48 = dma.done [#allocation3], 256
    $region13: #{tpu_custom_call.1} parent=1 // pred_fallthru
      _
    // Predicated region
    $region14: #{tpu_custom_call.1} parent=1 // pred_check
      _
    $region15: #{tpu_custom_call.1} parent=1 // pred_check_branch
      %50 = sbr.rel (0) target = $region17
    $region16: #{tpu_custom_call.1} parent=1 // pred_region
      %51 = dma.done [#allocation6], 256
    $region17: #{tpu_custom_call.1} parent=1 // pred_fallthru
      _
    %s52 = sadd.s32 0, 0
    %p53 = scmp.lt.s32.totalorder %s52, 0
    %s54 = scalar_select %p53, %s52, 0
    %s55 = smul.u32 2, %s54
    %s56 = sadd.s32 0, 0
    %p57 = scmp.lt.s32.totalorder %s56, 0
    %s58 = scalar_select %p57, %s56, 0
    %s59 = smul.u32 2, %s58
    %p60 = scmp.eq.s32.totalorder 0, 0
    // Predicated region
    $region18: #{tpu_custom_call.1} parent=1 // pred_check
      %p61 = pneg %p60
    $region19: #{tpu_custom_call.1} parent=1 // pred_check_branch
      %63 = sbr.rel (%p61) target = $region21
    $region20: #{tpu_custom_call.1} parent=1 // pred_region
      %64 = vst [vmem:[#allocation7] sm:$0xff] 0.0
      %65 = vst [vmem:[#allocation8] sm:$0xff] 0.0
      %66 = vst [vmem:[#allocation10] sm:$0xff] 0.0
    $region21: #{tpu_custom_call.1} parent=1 // pred_fallthru
      _
    %s67 = sadd.s32 0, 0
    %s68 = smul.u32 %s67, 256
    %s69 = ssub.s32 256, %s68
    %p70 = scmp.ge.s32.totalorder %s69, 256
    // Predicated region
    $region22: #{tpu_custom_call.1} parent=1 // pred_check
      %p71 = pneg %p70
    $region23: #{tpu_custom_call.1} parent=1 // pred_check_branch
      %73 = sbr.rel (%p71) target = $region25
    $region24: #{tpu_custom_call.1} parent=1 // pred_region
      %v74 = vld [vmem:[#allocation2] sm:$0xff]
      %v75 = vld [vmem:[#allocation5] sm:$0xff]
      %v76 = vmul.f32 %v74, 0.5
      %v77 = vtanh.pop %v76
      %v78 = vmul.f32 %v77, 0.5
      %v79 = vadd.f32 %v78, 0.5
      %vm80 = vcmp.ge.f32.partialorder %v74, 0.0
      %v81 = vsub.f32 1.0, %v79
      %v82 = vsel %vm80, %v79, %v81
      %v83 = vmax.f32 %v74, 0.0
      %v84 = vmul.f32 %v74, %v75
      %v85 = vsub.f32 %v83, %v84
      %v86 = vlog2.pop %v82
      %v87 = vmul.f32 %v86, 0.6931472
      %v88 = vsub.f32 %v85, %v87
      %v89 = vmul.f32 %v79, %v75
      %v90 = vadd.f32 %v79, %v75
      %v91 = vadd.f32 %v89, 0.0
      %v92 = vadd.f32 %v90, 0.0
      %v93 = vadd.f32 %v88, 0.0
      %s94 = scalar_lea.vmem [#allocation2], 8
      %v95 = vld [vmem:[%s94] sm:$0xff]
      %s96 = scalar_lea.vmem [#allocation5], 8
      %v97 = vld [vmem:[%s96] sm:$0xff]
      %v98 = vmul.f32 %v95, 0.5
      %v99 = vtanh.pop %v98
      %v100 = vmul.f32 %v99, 0.5
      %v101 = vadd.f32 %v100, 0.5
      %vm102 = vcmp.ge.f32.partialorder %v95, 0.0
      %v103 = vsub.f32 1.0, %v101
      %v104 = vsel %vm102, %v101, %v103
      %v105 = vmax.f32 %v95, 0.0
      %v106 = vmul.f32 %v95, %v97
      %v107 = vsub.f32 %v105, %v106
      %v108 = vlog2.pop %v104
      %v109 = vmul.f32 %v108, 0.6931472
      %v110 = vsub.f32 %v107, %v109
      %v111 = vmul.f32 %v101, %v97
      %v112 = vadd.f32 %v101, %v97
      %v113 = vadd.f32 %v91, %v111
      %v114 = vadd.f32 %v92, %v112
      %v115 = vadd.f32 %v93, %v110
      %v116 = vld [vmem:[#allocation7] sm:$0xff]
      %v117 = vadd.f32 %v116, %v113
      %118 = vst [vmem:[#allocation7] sm:$0xff] %v117
      %v119 = vld [vmem:[#allocation8] sm:$0xff]
      %v120 = vadd.f32 %v119, %v114
      %121 = vst [vmem:[#allocation8] sm:$0xff] %v120
      %v122 = vld [vmem:[#allocation10] sm:$0xff]
      %v123 = vadd.f32 %v122, %v115
      %124 = vst [vmem:[#allocation10] sm:$0xff] %v123
    $region25: #{tpu_custom_call.1} parent=1 // pred_fallthru
      _
    %p125 = scmp.lt.s32.totalorder %s69, 256
    // Predicated region
    $region26: #{tpu_custom_call.1} parent=1 // pred_check
      %p126 = pneg %p125
    $region27: #{tpu_custom_call.1} parent=1 // pred_check_branch
      %128 = sbr.rel (%p126) target = $region29
    $region28: #{tpu_custom_call.1} parent=1 // pred_region
      %v129 = vlaneseq
      %v130 = vand.u32 %v129, 127
      %v131 = vld [vmem:[#allocation2] sm:$0xff]
      %v132 = vld [vmem:[#allocation5] sm:$0xff]
      %v133 = vmul.f32 %v131, 0.5
      %v134 = vtanh.pop %v133
      %v135 = vmul.f32 %v134, 0.5
      %v136 = vadd.f32 %v135, 0.5
      %vm137 = vcmp.ge.f32.partialorder %v131, 0.0
      %v138 = vsub.f32 1.0, %v136
      %v139 = vsel %vm137, %v136, %v138
      %v140 = vmax.f32 %v131, 0.0
      %v141 = vmul.f32 %v131, %v132
      %v142 = vsub.f32 %v140, %v141
      %v143 = vlog2.pop %v139
      %v144 = vmul.f32 %v143, 0.6931472
      %v145 = vsub.f32 %v142, %v144
      %v146 = vmul.f32 %v136, %v132
      %v147 = vadd.f32 %v136, %v132
      %s148 = ssub.s32 %s69, 0
      %v149 = vstv %s148
      %vm150 = vcmp.lt.s32.totalorder %v130, %v149
      %v151 = vsel %vm150, %v146, 0.0
      %v152 = vsel %vm150, %v147, 0.0
      %v153 = vsel %vm150, %v145, 0.0
      %v154 = vadd.f32 %v151, 0.0
      %v155 = vadd.f32 %v152, 0.0
      %v156 = vadd.f32 %v153, 0.0
      %s157 = scalar_lea.vmem [#allocation2], 8
      %v158 = vld [vmem:[%s157] sm:$0xff]
      %s159 = scalar_lea.vmem [#allocation5], 8
      %v160 = vld [vmem:[%s159] sm:$0xff]
      %v161 = vmul.f32 %v158, 0.5
      %v162 = vtanh.pop %v161
      %v163 = vmul.f32 %v162, 0.5
      %v164 = vadd.f32 %v163, 0.5
      %vm165 = vcmp.ge.f32.partialorder %v158, 0.0
      %v166 = vsub.f32 1.0, %v164
      %v167 = vsel %vm165, %v164, %v166
      %v168 = vmax.f32 %v158, 0.0
      %v169 = vmul.f32 %v158, %v160
      %v170 = vsub.f32 %v168, %v169
      %v171 = vlog2.pop %v167
      %v172 = vmul.f32 %v171, 0.6931472
      %v173 = vsub.f32 %v170, %v172
      %v174 = vmul.f32 %v164, %v160
      %v175 = vadd.f32 %v164, %v160
      %s176 = ssub.s32 %s69, 128
      %v177 = vstv %s176
      %vm178 = vcmp.lt.s32.totalorder %v130, %v177
      %v179 = vsel %vm178, %v174, 0.0
      %v180 = vsel %vm178, %v175, 0.0
      %v181 = vsel %vm178, %v173, 0.0
      %v182 = vadd.f32 %v154, %v179
      %v183 = vadd.f32 %v155, %v180
      %v184 = vadd.f32 %v156, %v181
      %v185 = vld [vmem:[#allocation7] sm:$0xff]
      %v186 = vadd.f32 %v185, %v182
      %187 = vst [vmem:[#allocation7] sm:$0xff] %v186
      %v188 = vld [vmem:[#allocation8] sm:$0xff]
      %v189 = vadd.f32 %v188, %v183
      %190 = vst [vmem:[#allocation8] sm:$0xff] %v189
      %v191 = vld [vmem:[#allocation10] sm:$0xff]
      %v192 = vadd.f32 %v191, %v184
      %193 = vst [vmem:[#allocation10] sm:$0xff] %v192
    $region29: #{tpu_custom_call.1} parent=1 // pred_fallthru
      _
    // Predicated region
    $region30: #{tpu_custom_call.1} parent=1 // pred_check
      _
    $region31: #{tpu_custom_call.1} parent=1 // pred_check_branch
      %195 = sbr.rel (0) target = $region33
    $region32: #{tpu_custom_call.1} parent=1 // pred_region
      %s197 = ssub.s32 128, 128
      %198 = vsyncadd [#allocation4], %s197
      %s200 = sshll.u32 [#allocation7], 4
      %s201 = int_to_ptr.vmem [resolvable:$true] %s200
      %203 = dma.vmem_to_hbm [thread:$0]  %s201, 128, %s2, [#allocation4]
    $region33: #{tpu_custom_call.1} parent=1 // pred_fallthru
      _
    // Predicated region
    $region34: #{tpu_custom_call.1} parent=1 // pred_check
      _
    $region35: #{tpu_custom_call.1} parent=1 // pred_check_branch
      %205 = sbr.rel (0) target = $region37
    $region36: #{tpu_custom_call.1} parent=1 // pred_region
      %s207 = ssub.s32 128, 128
      %208 = vsyncadd [#allocation9], %s207
      %s210 = sshll.u32 [#allocation8], 4
      %s211 = int_to_ptr.vmem [resolvable:$true] %s210
      %213 = dma.vmem_to_hbm [thread:$0]  %s211, 128, %s3, [#allocation9]
    $region37: #{tpu_custom_call.1} parent=1 // pred_fallthru
      _
    // Predicated region
    $region38: #{tpu_custom_call.1} parent=1 // pred_check
      _
    $region39: #{tpu_custom_call.1} parent=1 // pred_check_branch
      %215 = sbr.rel (0) target = $region41
    $region40: #{tpu_custom_call.1} parent=1 // pred_region
      %s217 = ssub.s32 128, 128
      %218 = vsyncadd [#allocation9], %s217
      %s220 = sshll.u32 [#allocation10], 4
      %s221 = int_to_ptr.vmem [resolvable:$true] %s220
      %223 = dma.vmem_to_hbm [thread:$0]  %s221, 128, %s4, [#allocation9]
    $region41: #{tpu_custom_call.1} parent=1 // pred_fallthru
      _
    // Predicated region
    $region42: #{tpu_custom_call.1} parent=1 // pred_check
      _
    $region43: #{tpu_custom_call.1} parent=1 // pred_check_branch
      %225 = sbr.rel (0) target = $region45
    $region44: #{tpu_custom_call.1} parent=1 // pred_region
      %226 = dma.done [#allocation4], 128
    $region45: #{tpu_custom_call.1} parent=1 // pred_fallthru
      _
    // Predicated region
    $region46: #{tpu_custom_call.1} parent=1 // pred_check
      _
    $region47: #{tpu_custom_call.1} parent=1 // pred_check_branch
      %228 = sbr.rel (0) target = $region49
    $region48: #{tpu_custom_call.1} parent=1 // pred_region
      %229 = dma.done [#allocation9], 128
    $region49: #{tpu_custom_call.1} parent=1 // pred_fallthru
      _
    // Predicated region
    $region50: #{tpu_custom_call.1} parent=1 // pred_check
      _
    $region51: #{tpu_custom_call.1} parent=1 // pred_check_branch
      %231 = sbr.rel (0) target = $region53
    $region52: #{tpu_custom_call.1} parent=1 // pred_region
      %232 = dma.done [#allocation9], 128
    $region53: #{tpu_custom_call.1} parent=1 // pred_fallthru
      _
    %233 = vsyncpa [#allocation3], 1
    %234 = vsyncpa [#allocation6], 1
    %235 = vsyncpa [#allocation4], 1
    %236 = vsyncpa [#allocation9], 1

</llo_original>
